<compile_context>
chip_gen: v6e
topology: v6e:2x2x1
jax: 0.10.0
libtpu: 0.0.40
codegen_flags: <defaults>
</compile_context>

<pallas_src>
import functools

import jax
import jax.numpy as jnp
from jax import lax
from jax.experimental import pallas as pl
from jax.experimental.pallas import tpu as pltpu


def _round_up(x, m):
    return ((x + m - 1) // m) * m


# ---------------------------------------------------------------------------
# Fused kernel: for each grid step, TT timesteps of
#   ff_t  = x_t @ W_ff^T
#   rec_t = s_t @ W_rec^T
#   s_{t+1} = out_t = ff_t + rec_t        (identity activation stand-in)
# ---------------------------------------------------------------------------

def _fused_recurrent_kernel(x_ref, wff_t_ref, wrec_t_ref, s0_ref,
                            out_ref, state_ref, *, tt, bp):
    tb = pl.program_id(0)

    @pl.when(tb == 0)
    def _():
        state_ref[...] = s0_ref[...]

    # Feed-forward term for all TT timesteps of this block in ONE matmul:
    # (TT*Bp, I) @ (I, Op) -> (TT*Bp, Op), f32 accumulation on the MXU.
    ff = jnp.dot(x_ref[...], wff_t_ref[...],
                 preferred_element_type=jnp.float32)

    state = state_ref[...]                              # (Bp, Op) f32
    for t in range(tt):                                 # static unroll
        # TODO(synk): self.neuron.get_spikes(state) is abstract in the base
        # class; identity stand-in (spikes == state), cast to bf16 for the MXU.
        s_bf = state.astype(jnp.bfloat16)
        rec = jnp.dot(s_bf, wrec_t_ref[...],
                      preferred_element_type=jnp.float32)
        comb = ff[t * bp:(t + 1) * bp, :] + rec
        # TODO(synk): self.activation(state, ff + rec) is abstract;
        # pass-through (new_state == output == ff + rec).
        out_ref[t * bp:(t + 1) * bp, :] = comb.astype(out_ref.dtype)
        state = comb
    state_ref[...] = state                              # carry to next block


# ---------------------------------------------------------------------------
# Parameter setup (done ONCE, not per forward step)
# ---------------------------------------------------------------------------

def init_recurrent_linear(w_ff, w_rec, weight_dtype=jnp.bfloat16):
    """Pre-transpose, pad (lane dim only) and down-cast the nn.Linear weights.

    w_ff : (output_size, input_size)   -- PyTorch nn.Linear layout
    w_rec: (output_size, output_size)
    """
    O, I = w_ff.shape
    assert w_rec.shape == (O, O)
    Op = _round_up(O, 128)
    # Only the output (lane) dim needs 128-padding; K stays at the true I.
    w_ff_t = jnp.pad(jnp.transpose(w_ff).astype(jnp.float32),
                     ((0, 0), (0, Op - O))).astype(weight_dtype)      # (I, Op)
    w_rec_t = jnp.pad(jnp.transpose(w_rec).astype(jnp.float32),
                      ((0, Op - O), (0, Op - O))).astype(weight_dtype)  # (Op, Op)
    return dict(I=I, O=O, Op=Op, w_ff_t=w_ff_t, w_rec_t=w_rec_t)


# ---------------------------------------------------------------------------
# Forward
# ---------------------------------------------------------------------------

def base_recurrent_linear_forward_sequence(params, state, inputs, *, tt=16):
    """Apply BaseRecurrentLinear.forward for T consecutive steps.

    inputs : (T, B, input_size)
    state  : (B, output_size) or None
    returns: (new_state (B, output_size), outputs (T, B, output_size))
    """
    T, B, I = inputs.shape
    O, Op = params["O"], params["Op"]
    assert I == params["I"]
    Bp = _round_up(B, 8)

    if state is None:
        # TODO(synk): reset_state() is abstract in the base class; use zeros.
        state = jnp.zeros((B, O), dtype=jnp.float32)

    TT = max(1, min(tt, T))           # timesteps per grid step
    Tp = _round_up(T, TT)

    # Pad once outside the loop: time up to a TT multiple, batch up to 8.
    # Padded rows/cols are zero and stay zero through the recurrence.
    x = jnp.pad(inputs.astype(jnp.float32),
                ((0, Tp - T), (0, Bp - B), (0, 0))).astype(jnp.bfloat16)
    x_flat = x.reshape(Tp * Bp, I)                         # free reshape
    s0 = jnp.pad(state.astype(jnp.float32),
                 ((0, Bp - B), (0, Op - O)))               # (Bp, Op) f32

    rows = TT * Bp

    # VMEM budget: double-buffered streams + resident weights/state/scratch.
    stream_bytes = 2 * (rows * I * 2 + rows * Op * 4)
    resident_bytes = I * Op * 2 + Op * Op * 2 + 2 * Bp * Op * 4
    vmem_limit = int(min(max(2 * (stream_bytes + resident_bytes), 8 << 20),
                         32 << 20))

    kernel = functools.partial(_fused_recurrent_kernel, tt=TT, bp=Bp)

    out_flat = pl.pallas_call(
        kernel,
        out_shape=jax.ShapeDtypeStruct((Tp * Bp, Op), jnp.float32),
        grid=(Tp // TT,),
        in_specs=[
            pl.BlockSpec((rows, I), lambda t: (t, 0)),     # x tile, streamed
            pl.BlockSpec((I, Op), lambda t: (0, 0)),       # W_ff^T resident
            pl.BlockSpec((Op, Op), lambda t: (0, 0)),      # W_rec^T resident
            pl.BlockSpec((Bp, Op), lambda t: (0, 0)),      # initial state resident
        ],
        out_specs=pl.BlockSpec((rows, Op), lambda t: (t, 0)),
        scratch_shapes=[pltpu.VMEM((Bp, Op), jnp.float32)],  # state across blocks
        compiler_params=pltpu.CompilerParams(
            dimension_semantics=("arbitrary",),              # time is sequential
            vmem_limit_bytes=vmem_limit),
        cost_estimate=pl.CostEstimate(
            flops=2 * Tp * Bp * Op * (I + Op),
            transcendentals=0,
            bytes_accessed=(Tp * Bp * I * 2 + Tp * Bp * Op * 4
                            + I * Op * 2 + Op * Op * 2 + Bp * Op * 4)),
    )(x_flat, params["w_ff_t"], params["w_rec_t"], s0)

    # Un-pad for the caller.  TODO(synk): fold this slice into the consumer if
    # it can operate on the padded (Tp, Bp, Op) layout directly.
    outputs = out_flat.reshape(Tp, Bp, Op)[:T, :B, :O]
    new_state = outputs[-1]            # identity activation => state == output
    return new_state, outputs


def base_recurrent_linear_forward(params, state, input_):
    """Single-step mirror of BaseRecurrentLinear.forward: (state, input_) -> (state, output)."""
    new_state, outputs = base_recurrent_linear_forward_sequence(
        params, state, input_[None], tt=1)
    return new_state, outputs[0]


# ---------------------------------------------------------------------------
# Demo / self-test
# ---------------------------------------------------------------------------

if __name__ == "__main__":
    key = jax.random.PRNGKey(0)
    k1, k2, k3, k4 = jax.random.split(key, 4)

    batch = 8
    input_size = 64
    output_size = 32
    seq = 8

    # Deterministic synthetic parameters (PyTorch nn.Linear weight layout).
    bound_ff = 1.0 / jnp.sqrt(input_size)
    bound_rec = 1.0 / jnp.sqrt(output_size)
    w_ff = jax.random.uniform(k1, (output_size, input_size),
                              minval=-bound_ff, maxval=bound_ff,
                              dtype=jnp.float32)
    w_rec = jax.random.uniform(k2, (output_size, output_size),
                               minval=-bound_rec, maxval=bound_rec,
                               dtype=jnp.float32)

    inputs = jax.random.normal(k3, (seq, batch, input_size), dtype=jnp.float32)
    state0 = jax.random.normal(k4, (batch, output_size), dtype=jnp.float32)

    params = init_recurrent_linear(w_ff, w_rec)

    new_state, outputs = base_recurrent_linear_forward_sequence(
        params, state0, inputs, tt=16)
    new_state = jax.block_until_ready(new_state)
    outputs = jax.block_until_ready(outputs)

    # Pure-JAX reference of the same T-step recurrence with the SAME bf16
    # quantization of matmul operands (f32 accumulation), so only accumulation
    # order differs from the kernel.
    def q(a):
        return a.astype(jnp.bfloat16).astype(jnp.float32)

    wff_q = q(w_ff)
    wrec_q = q(w_rec)

    def ref_step(s, x_t):
        ff = jnp.dot(q(x_t), wff_q.T, precision=jax.lax.Precision.HIGHEST)
        rec = jnp.dot(q(s), wrec_q.T, precision=jax.lax.Precision.HIGHEST)
        comb = ff + rec
        return comb, comb

    s_ref, outs_ref = jax.lax.scan(ref_step, state0, inputs)

    assert outputs.shape == (seq, batch, output_size)
    assert jnp.allclose(outputs, outs_ref, atol=2e-3, rtol=2e-3), \
        "sequence output mismatch vs reference"
    assert jnp.allclose(new_state, s_ref, atol=2e-3, rtol=2e-3), \
        "final state mismatch vs reference"

    # Single-step API (mirrors the module's forward signature).
    s1, o1 = base_recurrent_linear_forward(params, state0, inputs[0])
    s1 = jax.block_until_ready(s1)
    assert jnp.allclose(o1, outs_ref[0], atol=2e-3, rtol=2e-3), \
        "single-step output mismatch vs reference"

    print("KERNEL_OK")
</pallas_src>

<mosaic_0001>
module attributes {stable_mosaic.version = 11 : i64} {
  func.func @_fused_recurrent_kernel(%arg0: i32, %arg1: memref<64x64xbf16, #tpu.memory_space<vmem>>, %arg2: memref<64x128xbf16, #tpu.memory_space<vmem>>, %arg3: memref<128x128xbf16, #tpu.memory_space<vmem>>, %arg4: memref<8x128xf32, #tpu.memory_space<vmem>>, %arg5: memref<64x128xf32, #tpu.memory_space<vmem>>, %arg6: memref<8x128xf32, #tpu.memory_space<vmem>>) attributes {dimension_semantics = [#tpu.dimension_semantics<arbitrary>], iteration_bounds = array<i64: 1>, scalar_prefetch = 0 : i64, scratch_operands = 1 : i64, tpu.core_type = #tpu.core_type<tc>, window_params = [{transform_indices = @transform_0, window_bounds = array<i64: 64, 64>}, {pipeline_mode = #tpu.pipeline_mode<synchronous>, transform_indices = @transform_1, window_bounds = array<i64: 64, 128>}, {pipeline_mode = #tpu.pipeline_mode<synchronous>, transform_indices = @transform_2, window_bounds = array<i64: 128, 128>}, {pipeline_mode = #tpu.pipeline_mode<synchronous>, transform_indices = @transform_3, window_bounds = array<i64: 8, 128>}, {transform_indices = @transform_4, window_bounds = array<i64: 64, 128>}]} {
    %c0_i32 = arith.constant 0 : i32
    %0 = arith.cmpi eq, %arg0, %c0_i32 : i32
    %1 = arith.extui %0 : i1 to i32
    %c0_i32_0 = arith.constant 0 : i32
    %2 = arith.cmpi ne, %1, %c0_i32_0 : i32
    scf.if %2 {
      %c0_41 = arith.constant 0 : index
      %c0_42 = arith.constant 0 : index
      %56 = vector.load %arg4[%c0_41, %c0_42] : memref<8x128xf32, #tpu.memory_space<vmem>>, vector<8x128xf32>
      %c0_43 = arith.constant 0 : index
      %c0_44 = arith.constant 0 : index
      %57 = vector.load %arg6[%c0_43, %c0_44] : memref<8x128xf32, #tpu.memory_space<vmem>>, vector<8x128xf32>
      tpu.vector_store %arg6[%c0_43, %c0_44], %56 {strides = array<i32>} : memref<8x128xf32, #tpu.memory_space<vmem>>, vector<8x128xf32>,
    } else {
    }
    %c0 = arith.constant 0 : index
    %c0_1 = arith.constant 0 : index
    %3 = vector.load %arg1[%c0, %c0_1] : memref<64x64xbf16, #tpu.memory_space<vmem>>, vector<64x64xbf16>
    %c0_2 = arith.constant 0 : index
    %c0_3 = arith.constant 0 : index
    %4 = vector.load %arg2[%c0_2, %c0_3] : memref<64x128xbf16, #tpu.memory_space<vmem>>, vector<64x128xbf16>
    %cst = arith.constant dense<0.000000e+00> : vector<64x128xf32>
    %5 = tpu.matmul %3, %4, %cst {dimension_numbers = #tpu.dot_dimension_numbers<[1], [0], [0], [1], [0, 0, 1, 1], [], []>} : vector<64x64xbf16>, vector<64x128xbf16>, vector<64x128xf32> -> vector<64x128xf32>
    %c0_4 = arith.constant 0 : index
    %c0_5 = arith.constant 0 : index
    %6 = vector.load %arg6[%c0_4, %c0_5] : memref<8x128xf32, #tpu.memory_space<vmem>>, vector<8x128xf32>
    %7 = arith.truncf %6 : vector<8x128xf32> to vector<8x128xbf16>
    %c0_6 = arith.constant 0 : index
    %c0_7 = arith.constant 0 : index
    %8 = vector.load %arg3[%c0_6, %c0_7] : memref<128x128xbf16, #tpu.memory_space<vmem>>, vector<128x128xbf16>
    %cst_8 = arith.constant dense<0.000000e+00> : vector<8x128xf32>
    %9 = tpu.matmul %7, %8, %cst_8 {dimension_numbers = #tpu.dot_dimension_numbers<[1], [0], [0], [1], [0, 0, 1, 1], [], []>} : vector<8x128xbf16>, vector<128x128xbf16>, vector<8x128xf32> -> vector<8x128xf32>
    %10 = vector.extract_strided_slice %5 {offsets = [0, 0], sizes = [8, 128], strides = [1, 1]} : vector<64x128xf32> to vector<8x128xf32>
    %11 = arith.addf %10, %9 : vector<8x128xf32>
    %c0_9 = arith.constant 0 : index
    %c0_10 = arith.constant 0 : index
    %12 = vector.load %arg5[%c0_9, %c0_10] : memref<64x128xf32, #tpu.memory_space<vmem>>, vector<8x128xf32>
    tpu.vector_store %arg5[%c0_9, %c0_10], %11 {strides = array<i32>} : memref<64x128xf32, #tpu.memory_space<vmem>>, vector<8x128xf32>,
    %13 = arith.truncf %11 : vector<8x128xf32> to vector<8x128xbf16>
    %c0_11 = arith.constant 0 : index
    %c0_12 = arith.constant 0 : index
    %14 = vector.load %arg3[%c0_11, %c0_12] : memref<128x128xbf16, #tpu.memory_space<vmem>>, vector<128x128xbf16>
    %cst_13 = arith.constant dense<0.000000e+00> : vector<8x128xf32>
    %15 = tpu.matmul %13, %14, %cst_13 {dimension_numbers = #tpu.dot_dimension_numbers<[1], [0], [0], [1], [0, 0, 1, 1], [], []>} : vector<8x128xbf16>, vector<128x128xbf16>, vector<8x128xf32> -> vector<8x128xf32>
    %16 = vector.extract_strided_slice %5 {offsets = [8, 0], sizes = [8, 128], strides = [1, 1]} : vector<64x128xf32> to vector<8x128xf32>
    %17 = arith.addf %16, %15 : vector<8x128xf32>
    %c8 = arith.constant 8 : index
    %c0_14 = arith.constant 0 : index
    %18 = vector.load %arg5[%c8, %c0_14] : memref<64x128xf32, #tpu.memory_space<vmem>>, vector<8x128xf32>
    tpu.vector_store %arg5[%c8, %c0_14], %17 {strides = array<i32>} : memref<64x128xf32, #tpu.memory_space<vmem>>, vector<8x128xf32>,
    %19 = arith.truncf %17 : vector<8x128xf32> to vector<8x128xbf16>
    %c0_15 = arith.constant 0 : index
    %c0_16 = arith.constant 0 : index
    %20 = vector.load %arg3[%c0_15, %c0_16] : memref<128x128xbf16, #tpu.memory_space<vmem>>, vector<128x128xbf16>
    %cst_17 = arith.constant dense<0.000000e+00> : vector<8x128xf32>
    %21 = tpu.matmul %19, %20, %cst_17 {dimension_numbers = #tpu.dot_dimension_numbers<[1], [0], [0], [1], [0, 0, 1, 1], [], []>} : vector<8x128xbf16>, vector<128x128xbf16>, vector<8x128xf32> -> vector<8x128xf32>
    %22 = vector.extract_strided_slice %5 {offsets = [16, 0], sizes = [8, 128], strides = [1, 1]} : vector<64x128xf32> to vector<8x128xf32>
    %23 = arith.addf %22, %21 : vector<8x128xf32>
    %c16 = arith.constant 16 : index
    %c0_18 = arith.constant 0 : index
    %24 = vector.load %arg5[%c16, %c0_18] : memref<64x128xf32, #tpu.memory_space<vmem>>, vector<8x128xf32>
    tpu.vector_store %arg5[%c16, %c0_18], %23 {strides = array<i32>} : memref<64x128xf32, #tpu.memory_space<vmem>>, vector<8x128xf32>,
    %25 = arith.truncf %23 : vector<8x128xf32> to vector<8x128xbf16>
    %c0_19 = arith.constant 0 : index
    %c0_20 = arith.constant 0 : index
    %26 = vector.load %arg3[%c0_19, %c0_20] : memref<128x128xbf16, #tpu.memory_space<vmem>>, vector<128x128xbf16>
    %cst_21 = arith.constant dense<0.000000e+00> : vector<8x128xf32>
    %27 = tpu.matmul %25, %26, %cst_21 {dimension_numbers = #tpu.dot_dimension_numbers<[1], [0], [0], [1], [0, 0, 1, 1], [], []>} : vector<8x128xbf16>, vector<128x128xbf16>, vector<8x128xf32> -> vector<8x128xf32>
    %28 = vector.extract_strided_slice %5 {offsets = [24, 0], sizes = [8, 128], strides = [1, 1]} : vector<64x128xf32> to vector<8x128xf32>
    %29 = arith.addf %28, %27 : vector<8x128xf32>
    %c24 = arith.constant 24 : index
    %c0_22 = arith.constant 0 : index
    %30 = vector.load %arg5[%c24, %c0_22] : memref<64x128xf32, #tpu.memory_space<vmem>>, vector<8x128xf32>
    tpu.vector_store %arg5[%c24, %c0_22], %29 {strides = array<i32>} : memref<64x128xf32, #tpu.memory_space<vmem>>, vector<8x128xf32>,
    %31 = arith.truncf %29 : vector<8x128xf32> to vector<8x128xbf16>
    %c0_23 = arith.constant 0 : index
    %c0_24 = arith.constant 0 : index
    %32 = vector.load %arg3[%c0_23, %c0_24] : memref<128x128xbf16, #tpu.memory_space<vmem>>, vector<128x128xbf16>
    %cst_25 = arith.constant dense<0.000000e+00> : vector<8x128xf32>
    %33 = tpu.matmul %31, %32, %cst_25 {dimension_numbers = #tpu.dot_dimension_numbers<[1], [0], [0], [1], [0, 0, 1, 1], [], []>} : vector<8x128xbf16>, vector<128x128xbf16>, vector<8x128xf32> -> vector<8x128xf32>
    %34 = vector.extract_strided_slice %5 {offsets = [32, 0], sizes = [8, 128], strides = [1, 1]} : vector<64x128xf32> to vector<8x128xf32>
    %35 = arith.addf %34, %33 : vector<8x128xf32>
    %c32 = arith.constant 32 : index
    %c0_26 = arith.constant 0 : index
    %36 = vector.load %arg5[%c32, %c0_26] : memref<64x128xf32, #tpu.memory_space<vmem>>, vector<8x128xf32>
    tpu.vector_store %arg5[%c32, %c0_26], %35 {strides = array<i32>} : memref<64x128xf32, #tpu.memory_space<vmem>>, vector<8x128xf32>,
    %37 = arith.truncf %35 : vector<8x128xf32> to vector<8x128xbf16>
    %c0_27 = arith.constant 0 : index
    %c0_28 = arith.constant 0 : index
    %38 = vector.load %arg3[%c0_27, %c0_28] : memref<128x128xbf16, #tpu.memory_space<vmem>>, vector<128x128xbf16>
    %cst_29 = arith.constant dense<0.000000e+00> : vector<8x128xf32>
    %39 = tpu.matmul %37, %38, %cst_29 {dimension_numbers = #tpu.dot_dimension_numbers<[1], [0], [0], [1], [0, 0, 1, 1], [], []>} : vector<8x128xbf16>, vector<128x128xbf16>, vector<8x128xf32> -> vector<8x128xf32>
    %40 = vector.extract_strided_slice %5 {offsets = [40, 0], sizes = [8, 128], strides = [1, 1]} : vector<64x128xf32> to vector<8x128xf32>
    %41 = arith.addf %40, %39 : vector<8x128xf32>
    %c40 = arith.constant 40 : index
    %c0_30 = arith.constant 0 : index
    %42 = vector.load %arg5[%c40, %c0_30] : memref<64x128xf32, #tpu.memory_space<vmem>>, vector<8x128xf32>
    tpu.vector_store %arg5[%c40, %c0_30], %41 {strides = array<i32>} : memref<64x128xf32, #tpu.memory_space<vmem>>, vector<8x128xf32>,
    %43 = arith.truncf %41 : vector<8x128xf32> to vector<8x128xbf16>
    %c0_31 = arith.constant 0 : index
    %c0_32 = arith.constant 0 : index
    %44 = vector.load %arg3[%c0_31, %c0_32] : memref<128x128xbf16, #tpu.memory_space<vmem>>, vector<128x128xbf16>
    %cst_33 = arith.constant dense<0.000000e+00> : vector<8x128xf32>
    %45 = tpu.matmul %43, %44, %cst_33 {dimension_numbers = #tpu.dot_dimension_numbers<[1], [0], [0], [1], [0, 0, 1, 1], [], []>} : vector<8x128xbf16>, vector<128x128xbf16>, vector<8x128xf32> -> vector<8x128xf32>
    %46 = vector.extract_strided_slice %5 {offsets = [48, 0], sizes = [8, 128], strides = [1, 1]} : vector<64x128xf32> to vector<8x128xf32>
    %47 = arith.addf %46, %45 : vector<8x128xf32>
    %c48 = arith.constant 48 : index
    %c0_34 = arith.constant 0 : index
    %48 = vector.load %arg5[%c48, %c0_34] : memref<64x128xf32, #tpu.memory_space<vmem>>, vector<8x128xf32>
    tpu.vector_store %arg5[%c48, %c0_34], %47 {strides = array<i32>} : memref<64x128xf32, #tpu.memory_space<vmem>>, vector<8x128xf32>,
    %49 = arith.truncf %47 : vector<8x128xf32> to vector<8x128xbf16>
    %c0_35 = arith.constant 0 : index
    %c0_36 = arith.constant 0 : index
    %50 = vector.load %arg3[%c0_35, %c0_36] : memref<128x128xbf16, #tpu.memory_space<vmem>>, vector<128x128xbf16>
    %cst_37 = arith.constant dense<0.000000e+00> : vector<8x128xf32>
    %51 = tpu.matmul %49, %50, %cst_37 {dimension_numbers = #tpu.dot_dimension_numbers<[1], [0], [0], [1], [0, 0, 1, 1], [], []>} : vector<8x128xbf16>, vector<128x128xbf16>, vector<8x128xf32> -> vector<8x128xf32>
    %52 = vector.extract_strided_slice %5 {offsets = [56, 0], sizes = [8, 128], strides = [1, 1]} : vector<64x128xf32> to vector<8x128xf32>
    %53 = arith.addf %52, %51 : vector<8x128xf32>
    %c56 = arith.constant 56 : index
    %c0_38 = arith.constant 0 : index
    %54 = vector.load %arg5[%c56, %c0_38] : memref<64x128xf32, #tpu.memory_space<vmem>>, vector<8x128xf32>
    tpu.vector_store %arg5[%c56, %c0_38], %53 {strides = array<i32>} : memref<64x128xf32, #tpu.memory_space<vmem>>, vector<8x128xf32>,
    %c0_39 = arith.constant 0 : index
    %c0_40 = arith.constant 0 : index
    %55 = vector.load %arg6[%c0_39, %c0_40] : memref<8x128xf32, #tpu.memory_space<vmem>>, vector<8x128xf32>
    tpu.vector_store %arg6[%c0_39, %c0_40], %53 {strides = array<i32>} : memref<8x128xf32, #tpu.memory_space<vmem>>, vector<8x128xf32>,
    return
  }
  func.func @transform_0(%arg0: i32) -> (i32, i32) {
    %c0_i32 = arith.constant 0 : i32
    %c0_i32_0 = arith.constant 0 : i32
    return %arg0, %c0_i32 : i32, i32
  }
  func.func @transform_1(%arg0: i32) -> (i32, i32) {
    %c0_i32 = arith.constant 0 : i32
    %c0_i32_0 = arith.constant 0 : i32
    %c0_i32_1 = arith.constant 0 : i32
    return %c0_i32, %c0_i32_0 : i32, i32
  }
  func.func @transform_2(%arg0: i32) -> (i32, i32) {
    %c0_i32 = arith.constant 0 : i32
    %c0_i32_0 = arith.constant 0 : i32
    %c0_i32_1 = arith.constant 0 : i32
    return %c0_i32, %c0_i32_0 : i32, i32
  }
  func.func @transform_3(%arg0: i32) -> (i32, i32) {
    %c0_i32 = arith.constant 0 : i32
    %c0_i32_0 = arith.constant 0 : i32
    %c0_i32_1 = arith.constant 0 : i32
    return %c0_i32, %c0_i32_0 : i32, i32
  }
  func.func @transform_4(%arg0: i32) -> (i32, i32) {
    %c0_i32 = arith.constant 0 : i32
    %c0_i32_0 = arith.constant 0 : i32
    return %arg0, %c0_i32 : i32, i32
  }
}

</mosaic_0001>

<llo_original>
// kernel: tpu_custom_call.1
$region0: #{tpu_custom_call.1}
  #allocation0 [shape = 'u32[]', space=smem, size = 0x4, offset = 0x4, fixed_abs, tag = 'smem constant byte address 0x4 - core index']
  #allocation1 [shape = 'u32[144,128]{1,0:T(1,128)}', space=vmem, size = 0x12000, scoped, tag = 'internal scratch']
  #allocation2 [shape = 'f32[8,128]{1,0:T(8,128)}', space=vmem, size = 0x1000, scoped, tag = 'scratch operand']
  %s0 = inlined_call_operand.hbm [shape: bf16[64,64], index: 0, kind: input, shape index: {}]
  %s1 = inlined_call_operand.hbm [shape: bf16[64,128], index: 1, kind: input, shape index: {}]
  %s2 = inlined_call_operand.hbm [shape: bf16[128,128], index: 2, kind: input, shape index: {}]
  %s3 = inlined_call_operand.hbm [shape: f32[8,128], index: 3, kind: input, shape index: {}]
  %s4 = inlined_call_operand.hbm [shape: f32[64,128], index: 4, kind: output, shape index: {}]
  %s5 = sld [smem:[#allocation0]]
  $region46: #{tpu_custom_call.1} parent=0
    _
  %s7 = ssub.s32 1, %s5
  %s8 = scalar_select 0, %s7, %s5
  $region1: #{tpu_custom_call.1} parent=0
    #allocation3 [shape = 'u8[16384]{0}', space=vmem, size = 0x4000, scoped, tag = 'input window, operand 0, single buffered']
    #allocation4 [shape = 's32[1]{0}', space=sflag, size = 0x4, scoped, tag = 'scoped memory for tpu_custom_call.1']
    #allocation5 [shape = 's32[1]{0}', space=sflag, size = 0x4, scoped, tag = 'scoped memory for tpu_custom_call.1']
    #allocation6 [shape = 'u8[16384]{0}', space=vmem, size = 0x4000, scoped, tag = 'input window, operand 1, single buffered']
    #allocation7 [shape = 's32[1]{0}', space=sflag, size = 0x4, scoped, tag = 'scoped memory for tpu_custom_call.1']
    #allocation8 [shape = 'u8[32768]{0}', space=vmem, size = 0x8000, scoped, tag = 'input window, operand 2, single buffered']
    #allocation9 [shape = 'u8[4096]{0}', space=vmem, size = 0x1000, scoped, tag = 'input window, operand 3, single buffered']
    #allocation10 [shape = 's32[1]{0}', space=sflag, size = 0x4, scoped, tag = 'scoped memory for tpu_custom_call.1']
    #allocation11 [shape = 'u8[32768]{0}', space=vmem, size = 0x8000, scoped, tag = 'output window, operand 0, single buffered']
    %9 = vsyncpa [#allocation4], 0
    %10 = vsyncpa [#allocation7], 0
    %11 = vsyncpa [#allocation10], 0
    %12 = vsyncpa [#allocation5], 0
    // Predicated region
    $region2: #{tpu_custom_call.1} parent=1 // pred_check
      _
    $region3: #{tpu_custom_call.1} parent=1 // pred_check_branch
      %14 = sbr.rel (0) target = $region5
    $region4: #{tpu_custom_call.1} parent=1 // pred_region
      %s16 = ssub.s32 512, 512
      %17 = vsyncadd [#allocation4], %s16
      %s18 = sshll.u32 [#allocation3], 4
      %s19 = int_to_ptr.vmem [resolvable:$true] %s18
      %24 = dma.hbm_to_vmem [thread:$0]  %s0, 512, %s19, [#allocation4], 64, 64, 4
    $region5: #{tpu_custom_call.1} parent=1 // pred_fallthru
      _
    // Predicated region
    $region6: #{tpu_custom_call.1} parent=1 // pred_check
      _
    $region7: #{tpu_custom_call.1} parent=1 // pred_check_branch
      %26 = sbr.rel (0) target = $region9
    $region8: #{tpu_custom_call.1} parent=1 // pred_region
      %s28 = ssub.s32 512, 512
      %29 = vsyncadd [#allocation7], %s28
      %s30 = sshll.u32 [#allocation6], 4
      %s31 = int_to_ptr.vmem [resolvable:$true] %s30
      %36 = dma.hbm_to_vmem [thread:$0]  %s1, 512, %s31, [#allocation7], 64, 64, 4
    $region9: #{tpu_custom_call.1} parent=1 // pred_fallthru
      _
    // Predicated region
    $region10: #{tpu_custom_call.1} parent=1 // pred_check
      _
    $region11: #{tpu_custom_call.1} parent=1 // pred_check_branch
      %38 = sbr.rel (0) target = $region13
    $region12: #{tpu_custom_call.1} parent=1 // pred_region
      %s40 = ssub.s32 1024, 1024
      %41 = vsyncadd [#allocation7], %s40
      %s42 = sshll.u32 [#allocation8], 4
      %s43 = int_to_ptr.vmem [resolvable:$true] %s42
      %48 = dma.hbm_to_vmem [thread:$0]  %s2, 1024, %s43, [#allocation7], 64, 64, 4
    $region13: #{tpu_custom_call.1} parent=1 // pred_fallthru
      _
    // Predicated region
    $region14: #{tpu_custom_call.1} parent=1 // pred_check
      _
    $region15: #{tpu_custom_call.1} parent=1 // pred_check_branch
      %50 = sbr.rel (0) target = $region17
    $region16: #{tpu_custom_call.1} parent=1 // pred_region
      %s52 = ssub.s32 128, 128
      %53 = vsyncadd [#allocation10], %s52
      %s55 = sshll.u32 [#allocation9], 4
      %s56 = int_to_ptr.vmem [resolvable:$true] %s55
      %58 = dma.hbm_to_vmem [thread:$0]  %s3, 128, %s56, [#allocation10]
    $region17: #{tpu_custom_call.1} parent=1 // pred_fallthru
      _
    // Predicated region
    $region18: #{tpu_custom_call.1} parent=1 // pred_check
      _
    $region19: #{tpu_custom_call.1} parent=1 // pred_check_branch
      %60 = sbr.rel (0) target = $region21
    $region20: #{tpu_custom_call.1} parent=1 // pred_region
      %61 = dma.done [#allocation4], 512
    $region21: #{tpu_custom_call.1} parent=1 // pred_fallthru
      _
    // Predicated region
    $region22: #{tpu_custom_call.1} parent=1 // pred_check
      _
    $region23: #{tpu_custom_call.1} parent=1 // pred_check_branch
      %63 = sbr.rel (0) target = $region25
    $region24: #{tpu_custom_call.1} parent=1 // pred_region
      %64 = dma.done [#allocation7], 512
    $region25: #{tpu_custom_call.1} parent=1 // pred_fallthru
      _
    // Predicated region
    $region26: #{tpu_custom_call.1} parent=1 // pred_check
      _
    $region27: #{tpu_custom_call.1} parent=1 // pred_check_branch
      %66 = sbr.rel (0) target = $region29
    $region28: #{tpu_custom_call.1} parent=1 // pred_region
      %67 = dma.done [#allocation7], 1024
    $region29: #{tpu_custom_call.1} parent=1 // pred_fallthru
      _
    // Predicated region
    $region30: #{tpu_custom_call.1} parent=1 // pred_check
      _
    $region31: #{tpu_custom_call.1} parent=1 // pred_check_branch
      %69 = sbr.rel (0) target = $region33
    $region32: #{tpu_custom_call.1} parent=1 // pred_region
      %70 = dma.done [#allocation10], 128
    $region33: #{tpu_custom_call.1} parent=1 // pred_fallthru
      _
    %p72 = scmp.eq.s32.totalorder 0, 0
    // Predicated region
    $region34: #{tpu_custom_call.1} parent=1 // pred_check
      %p73 = pneg %p72
    $region35: #{tpu_custom_call.1} parent=1 // pred_check_branch
      %75 = sbr.rel (%p73) target = $region37
    $region36: #{tpu_custom_call.1} parent=1 // pred_region
      %v76 = vld [vmem:[#allocation9] sm:$0xff]
      %77 = vst [vmem:[#allocation2] sm:$0xff] %v76
    $region37: #{tpu_custom_call.1} parent=1 // pred_fallthru
      _
    %v78 = vld [vmem:[#allocation3] sm:$0xf]
    %v79 = vld [vmem:[#allocation3 + $0x4] sm:$0xf]
    %v80 = vld [vmem:[#allocation3 + $0x8] sm:$0xf]
    %v81 = vld [vmem:[#allocation3 + $0xc] sm:$0xf]
    %v82 = vld [vmem:[#allocation3 + $0x10] sm:$0xf]
    %v83 = vld [vmem:[#allocation3 + $0x14] sm:$0xf]
    %v84 = vld [vmem:[#allocation3 + $0x18] sm:$0xf]
    %v85 = vld [vmem:[#allocation3 + $0x1c] sm:$0xf]
    %v86 = vld [vmem:[#allocation6] sm:$0xf]
    %v87 = vld [vmem:[#allocation6 + $0x4] sm:$0xf]
    %v88 = vld [vmem:[#allocation6 + $0x8] sm:$0xf]
    %v89 = vld [vmem:[#allocation6 + $0xc] sm:$0xf]
    %v90 = vld [vmem:[#allocation6 + $0x10] sm:$0xf]
    %v91 = vld [vmem:[#allocation6 + $0x14] sm:$0xf]
    %v92 = vld [vmem:[#allocation6 + $0x18] sm:$0xf]
    %v93 = vld [vmem:[#allocation6 + $0x1c] sm:$0xf]
    %v102 = vunpack.c.l.b16 %v78
    %v103 = vunpack.c.l.b16 %v79
    %v104 = vunpack.c.l.b16 %v80
    %v105 = vunpack.c.l.b16 %v81
    %v106 = vunpack.c.l.b16 %v82
    %v107 = vunpack.c.l.b16 %v83
    %v108 = vunpack.c.l.b16 %v84
    %v109 = vunpack.c.l.b16 %v85
    %v110 = vpack.c.b16 %v103, %v102
    %v111 = vpack.c.b16 %v105, %v104
    %v112 = vpack.c.b16 %v107, %v106
    %v113 = vpack.c.b16 %v109, %v108
    %v122 = vunpack.c.l.b16 %v86
    %v123 = vunpack.c.l.b16 %v87
    %v124 = vunpack.c.l.b16 %v88
    %v125 = vunpack.c.l.b16 %v89
    %v126 = vunpack.c.l.b16 %v90
    %v127 = vunpack.c.l.b16 %v91
    %v128 = vunpack.c.l.b16 %v92
    %v129 = vunpack.c.l.b16 %v93
    %v130 = vpack.c.b16 %v123, %v122
    %v131 = vpack.c.b16 %v125, %v124
    %v132 = vpack.c.b16 %v127, %v126
    %v133 = vpack.c.b16 %v129, %v128
    %vm138 = vcmask 523264
    %v140 = vsel %vm138, %v110, 0
    %v143 = vsel %vm138, %v111, 0
    %v146 = vsel %vm138, %v112, 0
    %v149 = vsel %vm138, %v113, 0
    %151 = vmatprep.subr.bf16.mxu0 0
    %152 = vmatpush1.bf16.msra.mxu0 0
    %153 = vmatprep.subr.bf16.mxu0 0
    %154 = vmatpush1.bf16.msra.mxu0 0
    %155 = vmatprep.subr.bf16.mxu0 0
    %156 = vmatpush1.bf16.msra.mxu0 0
    %157 = vmatprep.subr.bf16.mxu0 0
    %158 = vmatpush1.bf16.msra.mxu0 0
    %159 = vmatprep.subr.bf16.mxu0 0
    %160 = vmatpush1.bf16.msra.mxu0 %v133
    %161 = vmatprep.subr.bf16.mxu0 0
    %162 = vmatpush1.bf16.msra.mxu0 %v132
    %163 = vmatprep.subr.bf16.mxu0 0
    %164 = vmatpush1.bf16.msra.mxu0 %v131
    %165 = vmatprep.subr.bf16.mxu0 0
    %166 = vmatpush1.bf16.msra.mxu0 %v130
    %167 = vmatprep.subr.bf16.mxu0 0
    %168 = vmatpush2.bf16.msra.mxu0 0
    %169 = vmatprep.subr.bf16.mxu0 0
    %170 = vmatpush2.bf16.msra.mxu0 0
    %171 = vmatprep.subr.bf16.mxu0 0
    %172 = vmatpush2.bf16.msra.mxu0 0
    %173 = vmatprep.subr.bf16.mxu0 0
    %174 = vmatpush2.bf16.msra.mxu0 0
    %175 = vmatprep.subr.bf16.mxu0 0
    %176 = vmatpush2.bf16.msra.mxu0 0
    %177 = vmatprep.subr.bf16.mxu0 0
    %178 = vmatpush2.bf16.msra.mxu0 0
    %179 = vmatprep.subr.bf16.mxu0 0
    %180 = vmatpush2.bf16.msra.mxu0 0
    %181 = vmatprep.subr.bf16.mxu0 0
    %182 = vmatpush2.bf16.msra.mxu0 0
    %183 = vmatprep.mubr.bf16.mxu0 0
    %184 = vmatmul.mubr.bf16.gmra.mxu0 %v140
    %v185 = vpop.f32.mrf.mxu0
    %v186 = vadd.f32 0.0, %v185
    %v187 = vpop.f32.mrf.mxu0
    %v188 = vpop.f32.mrf.mxu0
    %v189 = vadd.f32 0.0, %v188
    %v190 = vpop.f32.mrf.mxu0
    %191 = vmatprep.mubr.bf16.mxu0 0
    %192 = vmatmul.mubr.bf16.gmra.mxu0 %v143
    %v193 = vpop.f32.mrf.mxu0
    %v194 = vadd.f32 0.0, %v193
    %v195 = vpop.f32.mrf.mxu0
    %v196 = vpop.f32.mrf.mxu0
    %v197 = vadd.f32 0.0, %v196
    %v198 = vpop.f32.mrf.mxu0
    %199 = vmatprep.mubr.bf16.mxu0 0
    %200 = vmatmul.mubr.bf16.gmra.mxu0 %v146
    %v201 = vpop.f32.mrf.mxu0
    %v202 = vadd.f32 0.0, %v201
    %v203 = vpop.f32.mrf.mxu0
    %v204 = vpop.f32.mrf.mxu0
    %v205 = vadd.f32 0.0, %v204
    %v206 = vpop.f32.mrf.mxu0
    %207 = vmatprep.mubr.bf16.mxu0 0
    %208 = vmatmul.mubr.bf16.gmra.mxu0 %v149
    %v209 = vpop.f32.mrf.mxu0
    %v210 = vadd.f32 0.0, %v209
    %v211 = vpop.f32.mrf.mxu0
    %v212 = vpop.f32.mrf.mxu0
    %v213 = vadd.f32 0.0, %v212
    %v214 = vpop.f32.mrf.mxu0
    %215 = vdwg.mxu0
    %v216 = vld [vmem:[#allocation2] sm:$0xff]
    %v217 = vpack.c.bf16 %v216, %v216
    %v218 = vld [vmem:[#allocation8] sm:$0xf]
    %v219 = vld [vmem:[#allocation8 + $0x4] sm:$0xf]
    %v220 = vld [vmem:[#allocation8 + $0x8] sm:$0xf]
    %v221 = vld [vmem:[#allocation8 + $0xc] sm:$0xf]
    %v222 = vld [vmem:[#allocation8 + $0x10] sm:$0xf]
    %v223 = vld [vmem:[#allocation8 + $0x14] sm:$0xf]
    %v224 = vld [vmem:[#allocation8 + $0x18] sm:$0xf]
    %v225 = vld [vmem:[#allocation8 + $0x1c] sm:$0xf]
    %v226 = vld [vmem:[#allocation8 + $0x20] sm:$0xf]
    %v227 = vld [vmem:[#allocation8 + $0x24] sm:$0xf]
    %v228 = vld [vmem:[#allocation8 + $0x28] sm:$0xf]
    %v229 = vld [vmem:[#allocation8 + $0x2c] sm:$0xf]
    %v230 = vld [vmem:[#allocation8 + $0x30] sm:$0xf]
    %v231 = vld [vmem:[#allocation8 + $0x34] sm:$0xf]
    %v232 = vld [vmem:[#allocation8 + $0x38] sm:$0xf]
    %v233 = vld [vmem:[#allocation8 + $0x3c] sm:$0xf]
    %v250 = vunpack.c.l.b16 %v218
    %v251 = vunpack.c.l.b16 %v219
    %v252 = vunpack.c.l.b16 %v220
    %v253 = vunpack.c.l.b16 %v221
    %v254 = vunpack.c.l.b16 %v222
    %v255 = vunpack.c.l.b16 %v223
    %v256 = vunpack.c.l.b16 %v224
    %v257 = vunpack.c.l.b16 %v225
    %v258 = vunpack.c.l.b16 %v226
    %v259 = vunpack.c.l.b16 %v227
    %v260 = vunpack.c.l.b16 %v228
    %v261 = vunpack.c.l.b16 %v229
    %v262 = vunpack.c.l.b16 %v230
    %v263 = vunpack.c.l.b16 %v231
    %v264 = vunpack.c.l.b16 %v232
    %v265 = vunpack.c.l.b16 %v233
    %v266 = vpack.c.b16 %v251, %v250
    %v267 = vpack.c.b16 %v253, %v252
    %v268 = vpack.c.b16 %v255, %v254
    %v269 = vpack.c.b16 %v257, %v256
    %v270 = vpack.c.b16 %v259, %v258
    %v271 = vpack.c.b16 %v261, %v260
    %v272 = vpack.c.b16 %v263, %v262
    %v273 = vpack.c.b16 %v265, %v264
    %282 = vmatprep.subr.bf16.mxu0 0
    %283 = vmatpush1.bf16.msra.mxu0 %v273
    %284 = vmatprep.subr.bf16.mxu0 0
    %285 = vmatpush1.bf16.msra.mxu0 %v272
    %286 = vmatprep.subr.bf16.mxu0 0
    %287 = vmatpush1.bf16.msra.mxu0 %v271
    %288 = vmatprep.subr.bf16.mxu0 0
    %289 = vmatpush1.bf16.msra.mxu0 %v270
    %290 = vmatprep.subr.bf16.mxu0 0
    %291 = vmatpush1.bf16.msra.mxu0 %v269
    %292 = vmatprep.subr.bf16.mxu0 0
    %293 = vmatpush1.bf16.msra.mxu0 %v268
    %294 = vmatprep.subr.bf16.mxu0 0
    %295 = vmatpush1.bf16.msra.mxu0 %v267
    %296 = vmatprep.subr.bf16.mxu0 0
    %297 = vmatpush1.bf16.msra.mxu0 %v266
    %298 = vmatprep.subr.bf16.mxu0 0
    %299 = vmatpush2.bf16.msra.mxu0 0
    %300 = vmatprep.subr.bf16.mxu0 0
    %301 = vmatpush2.bf16.msra.mxu0 0
    %302 = vmatprep.subr.bf16.mxu0 0
    %303 = vmatpush2.bf16.msra.mxu0 0
    %304 = vmatprep.subr.bf16.mxu0 0
    %305 = vmatpush2.bf16.msra.mxu0 0
    %306 = vmatprep.subr.bf16.mxu0 0
    %307 = vmatpush2.bf16.msra.mxu0 0
    %308 = vmatprep.subr.bf16.mxu0 0
    %309 = vmatpush2.bf16.msra.mxu0 0
    %310 = vmatprep.subr.bf16.mxu0 0
    %311 = vmatpush2.bf16.msra.mxu0 0
    %312 = vmatprep.subr.bf16.mxu0 0
    %313 = vmatpush2.bf16.msra.mxu0 0
    %314 = vmatprep.mubr.bf16.mxu0 0
    %315 = vmatmul.mubr.bf16.gmra.mxu0 %v217
    %v316 = vpop.f32.mrf.mxu0
    %v317 = vadd.f32 0.0, %v316
    %v318 = vpop.f32.mrf.mxu0
    %v319 = vpop.f32.mrf.mxu0
    %v320 = vpop.f32.mrf.mxu0
    %321 = vdwg.mxu0
    %v322 = vadd.f32 %v186, %v317
    %323 = vst [vmem:[#allocation11] sm:$0xff] %v322
    %v324 = vpack.c.bf16 %v322, %v322
    %v325 = vld [vmem:[#allocation8] sm:$0xf]
    %v326 = vld [vmem:[#allocation8 + $0x4] sm:$0xf]
    %v327 = vld [vmem:[#allocation8 + $0x8] sm:$0xf]
    %v328 = vld [vmem:[#allocation8 + $0xc] sm:$0xf]
    %v329 = vld [vmem:[#allocation8 + $0x10] sm:$0xf]
    %v330 = vld [vmem:[#allocation8 + $0x14] sm:$0xf]
    %v331 = vld [vmem:[#allocation8 + $0x18] sm:$0xf]
    %v332 = vld [vmem:[#allocation8 + $0x1c] sm:$0xf]
    %v333 = vld [vmem:[#allocation8 + $0x20] sm:$0xf]
    %v334 = vld [vmem:[#allocation8 + $0x24] sm:$0xf]
    %v335 = vld [vmem:[#allocation8 + $0x28] sm:$0xf]
    %v336 = vld [vmem:[#allocation8 + $0x2c] sm:$0xf]
    %v337 = vld [vmem:[#allocation8 + $0x30] sm:$0xf]
    %v338 = vld [vmem:[#allocation8 + $0x34] sm:$0xf]
    %v339 = vld [vmem:[#allocation8 + $0x38] sm:$0xf]
    %v340 = vld [vmem:[#allocation8 + $0x3c] sm:$0xf]
    %v357 = vunpack.c.l.b16 %v325
    %v358 = vunpack.c.l.b16 %v326
    %v359 = vunpack.c.l.b16 %v327
    %v360 = vunpack.c.l.b16 %v328
    %v361 = vunpack.c.l.b16 %v329
    %v362 = vunpack.c.l.b16 %v330
    %v363 = vunpack.c.l.b16 %v331
    %v364 = vunpack.c.l.b16 %v332
    %v365 = vunpack.c.l.b16 %v333
    %v366 = vunpack.c.l.b16 %v334
    %v367 = vunpack.c.l.b16 %v335
    %v368 = vunpack.c.l.b16 %v336
    %v369 = vunpack.c.l.b16 %v337
    %v370 = vunpack.c.l.b16 %v338
    %v371 = vunpack.c.l.b16 %v339
    %v372 = vunpack.c.l.b16 %v340
    %v373 = vpack.c.b16 %v358, %v357
    %v374 = vpack.c.b16 %v360, %v359
    %v375 = vpack.c.b16 %v362, %v361
    %v376 = vpack.c.b16 %v364, %v363
    %v377 = vpack.c.b16 %v366, %v365
    %v378 = vpack.c.b16 %v368, %v367
    %v379 = vpack.c.b16 %v370, %v369
    %v380 = vpack.c.b16 %v372, %v371
    %389 = vmatprep.subr.bf16.mxu0 0
    %390 = vmatpush1.bf16.msra.mxu0 %v380
    %391 = vmatprep.subr.bf16.mxu0 0
    %392 = vmatpush1.bf16.msra.mxu0 %v379
    %393 = vmatprep.subr.bf16.mxu0 0
    %394 = vmatpush1.bf16.msra.mxu0 %v378
    %395 = vmatprep.subr.bf16.mxu0 0
    %396 = vmatpush1.bf16.msra.mxu0 %v377
    %397 = vmatprep.subr.bf16.mxu0 0
    %398 = vmatpush1.bf16.msra.mxu0 %v376
    %399 = vmatprep.subr.bf16.mxu0 0
    %400 = vmatpush1.bf16.msra.mxu0 %v375
    %401 = vmatprep.subr.bf16.mxu0 0
    %402 = vmatpush1.bf16.msra.mxu0 %v374
    %403 = vmatprep.subr.bf16.mxu0 0
    %404 = vmatpush1.bf16.msra.mxu0 %v373
    %405 = vmatprep.subr.bf16.mxu0 0
    %406 = vmatpush2.bf16.msra.mxu0 0
    %407 = vmatprep.subr.bf16.mxu0 0
    %408 = vmatpush2.bf16.msra.mxu0 0
    %409 = vmatprep.subr.bf16.mxu0 0
    %410 = vmatpush2.bf16.msra.mxu0 0
    %411 = vmatprep.subr.bf16.mxu0 0
    %412 = vmatpush2.bf16.msra.mxu0 0
    %413 = vmatprep.subr.bf16.mxu0 0
    %414 = vmatpush2.bf16.msra.mxu0 0
    %415 = vmatprep.subr.bf16.mxu0 0
    %416 = vmatpush2.bf16.msra.mxu0 0
    %417 = vmatprep.subr.bf16.mxu0 0
    %418 = vmatpush2.bf16.msra.mxu0 0
    %419 = vmatprep.subr.bf16.mxu0 0
    %420 = vmatpush2.bf16.msra.mxu0 0
    %421 = vmatprep.mubr.bf16.mxu0 0
    %422 = vmatmul.mubr.bf16.gmra.mxu0 %v324
    %v423 = vpop.f32.mrf.mxu0
    %v424 = vadd.f32 0.0, %v423
    %v425 = vpop.f32.mrf.mxu0
    %v426 = vpop.f32.mrf.mxu0
    %v427 = vpop.f32.mrf.mxu0
    %428 = vdwg.mxu0
    %v429 = vadd.f32 %v189, %v424
    %430 = vst [vmem:[#allocation11 + $0x8] sm:$0xff] %v429
    %v431 = vpack.c.bf16 %v429, %v429
    %v432 = vld [vmem:[#allocation8] sm:$0xf]
    %v433 = vld [vmem:[#allocation8 + $0x4] sm:$0xf]
    %v434 = vld [vmem:[#allocation8 + $0x8] sm:$0xf]
    %v435 = vld [vmem:[#allocation8 + $0xc] sm:$0xf]
    %v436 = vld [vmem:[#allocation8 + $0x10] sm:$0xf]
    %v437 = vld [vmem:[#allocation8 + $0x14] sm:$0xf]
    %v438 = vld [vmem:[#allocation8 + $0x18] sm:$0xf]
    %v439 = vld [vmem:[#allocation8 + $0x1c] sm:$0xf]
    %v440 = vld [vmem:[#allocation8 + $0x20] sm:$0xf]
    %v441 = vld [vmem:[#allocation8 + $0x24] sm:$0xf]
    %v442 = vld [vmem:[#allocation8 + $0x28] sm:$0xf]
    %v443 = vld [vmem:[#allocation8 + $0x2c] sm:$0xf]
    %v444 = vld [vmem:[#allocation8 + $0x30] sm:$0xf]
    %v445 = vld [vmem:[#allocation8 + $0x34] sm:$0xf]
    %v446 = vld [vmem:[#allocation8 + $0x38] sm:$0xf]
    %v447 = vld [vmem:[#allocation8 + $0x3c] sm:$0xf]
    %v464 = vunpack.c.l.b16 %v432
    %v465 = vunpack.c.l.b16 %v433
    %v466 = vunpack.c.l.b16 %v434
    %v467 = vunpack.c.l.b16 %v435
    %v468 = vunpack.c.l.b16 %v436
    %v469 = vunpack.c.l.b16 %v437
    %v470 = vunpack.c.l.b16 %v438
    %v471 = vunpack.c.l.b16 %v439
    %v472 = vunpack.c.l.b16 %v440
    %v473 = vunpack.c.l.b16 %v441
    %v474 = vunpack.c.l.b16 %v442
    %v475 = vunpack.c.l.b16 %v443
    %v476 = vunpack.c.l.b16 %v444
    %v477 = vunpack.c.l.b16 %v445
    %v478 = vunpack.c.l.b16 %v446
    %v479 = vunpack.c.l.b16 %v447
    %v480 = vpack.c.b16 %v465, %v464
    %v481 = vpack.c.b16 %v467, %v466
    %v482 = vpack.c.b16 %v469, %v468
    %v483 = vpack.c.b16 %v471, %v470
    %v484 = vpack.c.b16 %v473, %v472
    %v485 = vpack.c.b16 %v475, %v474
    %v486 = vpack.c.b16 %v477, %v476
    %v487 = vpack.c.b16 %v479, %v478
    %496 = vmatprep.subr.bf16.mxu0 0
    %497 = vmatpush1.bf16.msra.mxu0 %v487
    %498 = vmatprep.subr.bf16.mxu0 0
    %499 = vmatpush1.bf16.msra.mxu0 %v486
    %500 = vmatprep.subr.bf16.mxu0 0
    %501 = vmatpush1.bf16.msra.mxu0 %v485
    %502 = vmatprep.subr.bf16.mxu0 0
    %503 = vmatpush1.bf16.msra.mxu0 %v484
    %504 = vmatprep.subr.bf16.mxu0 0
    %505 = vmatpush1.bf16.msra.mxu0 %v483
    %506 = vmatprep.subr.bf16.mxu0 0
    %507 = vmatpush1.bf16.msra.mxu0 %v482
    %508 = vmatprep.subr.bf16.mxu0 0
    %509 = vmatpush1.bf16.msra.mxu0 %v481
    %510 = vmatprep.subr.bf16.mxu0 0
    %511 = vmatpush1.bf16.msra.mxu0 %v480
    %512 = vmatprep.subr.bf16.mxu0 0
    %513 = vmatpush2.bf16.msra.mxu0 0
    %514 = vmatprep.subr.bf16.mxu0 0
    %515 = vmatpush2.bf16.msra.mxu0 0
    %516 = vmatprep.subr.bf16.mxu0 0
    %517 = vmatpush2.bf16.msra.mxu0 0
    %518 = vmatprep.subr.bf16.mxu0 0
    %519 = vmatpush2.bf16.msra.mxu0 0
    %520 = vmatprep.subr.bf16.mxu0 0
    %521 = vmatpush2.bf16.msra.mxu0 0
    %522 = vmatprep.subr.bf16.mxu0 0
    %523 = vmatpush2.bf16.msra.mxu0 0
    %524 = vmatprep.subr.bf16.mxu0 0
    %525 = vmatpush2.bf16.msra.mxu0 0
    %526 = vmatprep.subr.bf16.mxu0 0
    %527 = vmatpush2.bf16.msra.mxu0 0
    %528 = vmatprep.mubr.bf16.mxu0 0
    %529 = vmatmul.mubr.bf16.gmra.mxu0 %v431
    %v530 = vpop.f32.mrf.mxu0
    %v531 = vadd.f32 0.0, %v530
    %v532 = vpop.f32.mrf.mxu0
    %v533 = vpop.f32.mrf.mxu0
    %v534 = vpop.f32.mrf.mxu0
    %535 = vdwg.mxu0
    %v536 = vadd.f32 %v194, %v531
    %537 = vst [vmem:[#allocation11 + $0x10] sm:$0xff] %v536
    %v538 = vpack.c.bf16 %v536, %v536
    %v539 = vld [vmem:[#allocation8] sm:$0xf]
    %v540 = vld [vmem:[#allocation8 + $0x4] sm:$0xf]
    %v541 = vld [vmem:[#allocation8 + $0x8] sm:$0xf]
    %v542 = vld [vmem:[#allocation8 + $0xc] sm:$0xf]
    %v543 = vld [vmem:[#allocation8 + $0x10] sm:$0xf]
    %v544 = vld [vmem:[#allocation8 + $0x14] sm:$0xf]
    %v545 = vld [vmem:[#allocation8 + $0x18] sm:$0xf]
    %v546 = vld [vmem:[#allocation8 + $0x1c] sm:$0xf]
    %v547 = vld [vmem:[#allocation8 + $0x20] sm:$0xf]
    %v548 = vld [vmem:[#allocation8 + $0x24] sm:$0xf]
    %v549 = vld [vmem:[#allocation8 + $0x28] sm:$0xf]
    %v550 = vld [vmem:[#allocation8 + $0x2c] sm:$0xf]
    %v551 = vld [vmem:[#allocation8 + $0x30] sm:$0xf]
    %v552 = vld [vmem:[#allocation8 + $0x34] sm:$0xf]
    %v553 = vld [vmem:[#allocation8 + $0x38] sm:$0xf]
    %v554 = vld [vmem:[#allocation8 + $0x3c] sm:$0xf]
    %v571 = vunpack.c.l.b16 %v539
    %v572 = vunpack.c.l.b16 %v540
    %v573 = vunpack.c.l.b16 %v541
    %v574 = vunpack.c.l.b16 %v542
    %v575 = vunpack.c.l.b16 %v543
    %v576 = vunpack.c.l.b16 %v544
    %v577 = vunpack.c.l.b16 %v545
    %v578 = vunpack.c.l.b16 %v546
    %v579 = vunpack.c.l.b16 %v547
    %v580 = vunpack.c.l.b16 %v548
    %v581 = vunpack.c.l.b16 %v549
    %v582 = vunpack.c.l.b16 %v550
    %v583 = vunpack.c.l.b16 %v551
    %v584 = vunpack.c.l.b16 %v552
    %v585 = vunpack.c.l.b16 %v553
    %v586 = vunpack.c.l.b16 %v554
    %v587 = vpack.c.b16 %v572, %v571
    %v588 = vpack.c.b16 %v574, %v573
    %v589 = vpack.c.b16 %v576, %v575
    %v590 = vpack.c.b16 %v578, %v577
    %v591 = vpack.c.b16 %v580, %v579
    %v592 = vpack.c.b16 %v582, %v581
    %v593 = vpack.c.b16 %v584, %v583
    %v594 = vpack.c.b16 %v586, %v585
    %603 = vmatprep.subr.bf16.mxu0 0
    %604 = vmatpush1.bf16.msra.mxu0 %v594
    %605 = vmatprep.subr.bf16.mxu0 0
    %606 = vmatpush1.bf16.msra.mxu0 %v593
    %607 = vmatprep.subr.bf16.mxu0 0
    %608 = vmatpush1.bf16.msra.mxu0 %v592
    %609 = vmatprep.subr.bf16.mxu0 0
    %610 = vmatpush1.bf16.msra.mxu0 %v591
    %611 = vmatprep.subr.bf16.mxu0 0
    %612 = vmatpush1.bf16.msra.mxu0 %v590
    %613 = vmatprep.subr.bf16.mxu0 0
    %614 = vmatpush1.bf16.msra.mxu0 %v589
    %615 = vmatprep.subr.bf16.mxu0 0
    %616 = vmatpush1.bf16.msra.mxu0 %v588
    %617 = vmatprep.subr.bf16.mxu0 0
    %618 = vmatpush1.bf16.msra.mxu0 %v587
    %619 = vmatprep.subr.bf16.mxu0 0
    %620 = vmatpush2.bf16.msra.mxu0 0
    %621 = vmatprep.subr.bf16.mxu0 0
    %622 = vmatpush2.bf16.msra.mxu0 0
    %623 = vmatprep.subr.bf16.mxu0 0
    %624 = vmatpush2.bf16.msra.mxu0 0
    %625 = vmatprep.subr.bf16.mxu0 0
    %626 = vmatpush2.bf16.msra.mxu0 0
    %627 = vmatprep.subr.bf16.mxu0 0
    %628 = vmatpush2.bf16.msra.mxu0 0
    %629 = vmatprep.subr.bf16.mxu0 0
    %630 = vmatpush2.bf16.msra.mxu0 0
    %631 = vmatprep.subr.bf16.mxu0 0
    %632 = vmatpush2.bf16.msra.mxu0 0
    %633 = vmatprep.subr.bf16.mxu0 0
    %634 = vmatpush2.bf16.msra.mxu0 0
    %635 = vmatprep.mubr.bf16.mxu0 0
    %636 = vmatmul.mubr.bf16.gmra.mxu0 %v538
    %v637 = vpop.f32.mrf.mxu0
    %v638 = vadd.f32 0.0, %v637
    %v639 = vpop.f32.mrf.mxu0
    %v640 = vpop.f32.mrf.mxu0
    %v641 = vpop.f32.mrf.mxu0
    %642 = vdwg.mxu0
    %v643 = vadd.f32 %v197, %v638
    %644 = vst [vmem:[#allocation11 + $0x18] sm:$0xff] %v643
    %v645 = vpack.c.bf16 %v643, %v643
    %v646 = vld [vmem:[#allocation8] sm:$0xf]
    %v647 = vld [vmem:[#allocation8 + $0x4] sm:$0xf]
    %v648 = vld [vmem:[#allocation8 + $0x8] sm:$0xf]
    %v649 = vld [vmem:[#allocation8 + $0xc] sm:$0xf]
    %v650 = vld [vmem:[#allocation8 + $0x10] sm:$0xf]
    %v651 = vld [vmem:[#allocation8 + $0x14] sm:$0xf]
    %v652 = vld [vmem:[#allocation8 + $0x18] sm:$0xf]
    %v653 = vld [vmem:[#allocation8 + $0x1c] sm:$0xf]
    %v654 = vld [vmem:[#allocation8 + $0x20] sm:$0xf]
    %v655 = vld [vmem:[#allocation8 + $0x24] sm:$0xf]
    %v656 = vld [vmem:[#allocation8 + $0x28] sm:$0xf]
    %v657 = vld [vmem:[#allocation8 + $0x2c] sm:$0xf]
    %v658 = vld [vmem:[#allocation8 + $0x30] sm:$0xf]
    %v659 = vld [vmem:[#allocation8 + $0x34] sm:$0xf]
    %v660 = vld [vmem:[#allocation8 + $0x38] sm:$0xf]
    %v661 = vld [vmem:[#allocation8 + $0x3c] sm:$0xf]
    %v678 = vunpack.c.l.b16 %v646
    %v679 = vunpack.c.l.b16 %v647
    %v680 = vunpack.c.l.b16 %v648
    %v681 = vunpack.c.l.b16 %v649
    %v682 = vunpack.c.l.b16 %v650
    %v683 = vunpack.c.l.b16 %v651
    %v684 = vunpack.c.l.b16 %v652
    %v685 = vunpack.c.l.b16 %v653
    %v686 = vunpack.c.l.b16 %v654
    %v687 = vunpack.c.l.b16 %v655
    %v688 = vunpack.c.l.b16 %v656
    %v689 = vunpack.c.l.b16 %v657
    %v690 = vunpack.c.l.b16 %v658
    %v691 = vunpack.c.l.b16 %v659
    %v692 = vunpack.c.l.b16 %v660
    %v693 = vunpack.c.l.b16 %v661
    %v694 = vpack.c.b16 %v679, %v678
    %v695 = vpack.c.b16 %v681, %v680
    %v696 = vpack.c.b16 %v683, %v682
    %v697 = vpack.c.b16 %v685, %v684
    %v698 = vpack.c.b16 %v687, %v686
    %v699 = vpack.c.b16 %v689, %v688
    %v700 = vpack.c.b16 %v691, %v690
    %v701 = vpack.c.b16 %v693, %v692
    %710 = vmatprep.subr.bf16.mxu0 0
    %711 = vmatpush1.bf16.msra.mxu0 %v701
    %712 = vmatprep.subr.bf16.mxu0 0
    %713 = vmatpush1.bf16.msra.mxu0 %v700
    %714 = vmatprep.subr.bf16.mxu0 0
    %715 = vmatpush1.bf16.msra.mxu0 %v699
    %716 = vmatprep.subr.bf16.mxu0 0
    %717 = vmatpush1.bf16.msra.mxu0 %v698
    %718 = vmatprep.subr.bf16.mxu0 0
    %719 = vmatpush1.bf16.msra.mxu0 %v697
    %720 = vmatprep.subr.bf16.mxu0 0
    %721 = vmatpush1.bf16.msra.mxu0 %v696
    %722 = vmatprep.subr.bf16.mxu0 0
    %723 = vmatpush1.bf16.msra.mxu0 %v695
    %724 = vmatprep.subr.bf16.mxu0 0
    %725 = vmatpush1.bf16.msra.mxu0 %v694
    %726 = vmatprep.subr.bf16.mxu0 0
    %727 = vmatpush2.bf16.msra.mxu0 0
    %728 = vmatprep.subr.bf16.mxu0 0
    %729 = vmatpush2.bf16.msra.mxu0 0
    %730 = vmatprep.subr.bf16.mxu0 0
    %731 = vmatpush2.bf16.msra.mxu0 0
    %732 = vmatprep.subr.bf16.mxu0 0
    %733 = vmatpush2.bf16.msra.mxu0 0
    %734 = vmatprep.subr.bf16.mxu0 0
    %735 = vmatpush2.bf16.msra.mxu0 0
    %736 = vmatprep.subr.bf16.mxu0 0
    %737 = vmatpush2.bf16.msra.mxu0 0
    %738 = vmatprep.subr.bf16.mxu0 0
    %739 = vmatpush2.bf16.msra.mxu0 0
    %740 = vmatprep.subr.bf16.mxu0 0
    %741 = vmatpush2.bf16.msra.mxu0 0
    %742 = vmatprep.mubr.bf16.mxu0 0
    %743 = vmatmul.mubr.bf16.gmra.mxu0 %v645
    %v744 = vpop.f32.mrf.mxu0
    %v745 = vadd.f32 0.0, %v744
    %v746 = vpop.f32.mrf.mxu0
    %v747 = vpop.f32.mrf.mxu0
    %v748 = vpop.f32.mrf.mxu0
    %749 = vdwg.mxu0
    %v750 = vadd.f32 %v202, %v745
    %751 = vst [vmem:[#allocation11 + $0x20] sm:$0xff] %v750
    %v752 = vpack.c.bf16 %v750, %v750
    %v753 = vld [vmem:[#allocation8] sm:$0xf]
    %v754 = vld [vmem:[#allocation8 + $0x4] sm:$0xf]
    %v755 = vld [vmem:[#allocation8 + $0x8] sm:$0xf]
    %v756 = vld [vmem:[#allocation8 + $0xc] sm:$0xf]
    %v757 = vld [vmem:[#allocation8 + $0x10] sm:$0xf]
    %v758 = vld [vmem:[#allocation8 + $0x14] sm:$0xf]
    %v759 = vld [vmem:[#allocation8 + $0x18] sm:$0xf]
    %v760 = vld [vmem:[#allocation8 + $0x1c] sm:$0xf]
    %v761 = vld [vmem:[#allocation8 + $0x20] sm:$0xf]
    %v762 = vld [vmem:[#allocation8 + $0x24] sm:$0xf]
    %v763 = vld [vmem:[#allocation8 + $0x28] sm:$0xf]
    %v764 = vld [vmem:[#allocation8 + $0x2c] sm:$0xf]
    %v765 = vld [vmem:[#allocation8 + $0x30] sm:$0xf]
    %v766 = vld [vmem:[#allocation8 + $0x34] sm:$0xf]
    %v767 = vld [vmem:[#allocation8 + $0x38] sm:$0xf]
    %v768 = vld [vmem:[#allocation8 + $0x3c] sm:$0xf]
    %v785 = vunpack.c.l.b16 %v753
    %v786 = vunpack.c.l.b16 %v754
    %v787 = vunpack.c.l.b16 %v755
    %v788 = vunpack.c.l.b16 %v756
    %v789 = vunpack.c.l.b16 %v757
    %v790 = vunpack.c.l.b16 %v758
    %v791 = vunpack.c.l.b16 %v759
    %v792 = vunpack.c.l.b16 %v760
    %v793 = vunpack.c.l.b16 %v761
    %v794 = vunpack.c.l.b16 %v762
    %v795 = vunpack.c.l.b16 %v763
    %v796 = vunpack.c.l.b16 %v764
    %v797 = vunpack.c.l.b16 %v765
    %v798 = vunpack.c.l.b16 %v766
    %v799 = vunpack.c.l.b16 %v767
    %v800 = vunpack.c.l.b16 %v768
    %v801 = vpack.c.b16 %v786, %v785
    %v802 = vpack.c.b16 %v788, %v787
    %v803 = vpack.c.b16 %v790, %v789
    %v804 = vpack.c.b16 %v792, %v791
    %v805 = vpack.c.b16 %v794, %v793
    %v806 = vpack.c.b16 %v796, %v795
    %v807 = vpack.c.b16 %v798, %v797
    %v808 = vpack.c.b16 %v800, %v799
    %817 = vmatprep.subr.bf16.mxu0 0
    %818 = vmatpush1.bf16.msra.mxu0 %v808
    %819 = vmatprep.subr.bf16.mxu0 0
    %820 = vmatpush1.bf16.msra.mxu0 %v807
    %821 = vmatprep.subr.bf16.mxu0 0
    %822 = vmatpush1.bf16.msra.mxu0 %v806
    %823 = vmatprep.subr.bf16.mxu0 0
    %824 = vmatpush1.bf16.msra.mxu0 %v805
    %825 = vmatprep.subr.bf16.mxu0 0
    %826 = vmatpush1.bf16.msra.mxu0 %v804
    %827 = vmatprep.subr.bf16.mxu0 0
    %828 = vmatpush1.bf16.msra.mxu0 %v803
    %829 = vmatprep.subr.bf16.mxu0 0
    %830 = vmatpush1.bf16.msra.mxu0 %v802
    %831 = vmatprep.subr.bf16.mxu0 0
    %832 = vmatpush1.bf16.msra.mxu0 %v801
    %833 = vmatprep.subr.bf16.mxu0 0
    %834 = vmatpush2.bf16.msra.mxu0 0
    %835 = vmatprep.subr.bf16.mxu0 0
    %836 = vmatpush2.bf16.msra.mxu0 0
    %837 = vmatprep.subr.bf16.mxu0 0
    %838 = vmatpush2.bf16.msra.mxu0 0
    %839 = vmatprep.subr.bf16.mxu0 0
    %840 = vmatpush2.bf16.msra.mxu0 0
    %841 = vmatprep.subr.bf16.mxu0 0
    %842 = vmatpush2.bf16.msra.mxu0 0
    %843 = vmatprep.subr.bf16.mxu0 0
    %844 = vmatpush2.bf16.msra.mxu0 0
    %845 = vmatprep.subr.bf16.mxu0 0
    %846 = vmatpush2.bf16.msra.mxu0 0
    %847 = vmatprep.subr.bf16.mxu0 0
    %848 = vmatpush2.bf16.msra.mxu0 0
    %849 = vmatprep.mubr.bf16.mxu0 0
    %850 = vmatmul.mubr.bf16.gmra.mxu0 %v752
    %v851 = vpop.f32.mrf.mxu0
    %v852 = vadd.f32 0.0, %v851
    %v853 = vpop.f32.mrf.mxu0
    %v854 = vpop.f32.mrf.mxu0
    %v855 = vpop.f32.mrf.mxu0
    %856 = vdwg.mxu0
    %v857 = vadd.f32 %v205, %v852
    %858 = vst [vmem:[#allocation11 + $0x28] sm:$0xff] %v857
    %v859 = vpack.c.bf16 %v857, %v857
    %v860 = vld [vmem:[#allocation8] sm:$0xf]
    %v861 = vld [vmem:[#allocation8 + $0x4] sm:$0xf]
    %v862 = vld [vmem:[#allocation8 + $0x8] sm:$0xf]
    %v863 = vld [vmem:[#allocation8 + $0xc] sm:$0xf]
    %v864 = vld [vmem:[#allocation8 + $0x10] sm:$0xf]
    %v865 = vld [vmem:[#allocation8 + $0x14] sm:$0xf]
    %v866 = vld [vmem:[#allocation8 + $0x18] sm:$0xf]
    %v867 = vld [vmem:[#allocation8 + $0x1c] sm:$0xf]
    %v868 = vld [vmem:[#allocation8 + $0x20] sm:$0xf]
    %v869 = vld [vmem:[#allocation8 + $0x24] sm:$0xf]
    %v870 = vld [vmem:[#allocation8 + $0x28] sm:$0xf]
    %v871 = vld [vmem:[#allocation8 + $0x2c] sm:$0xf]
    %v872 = vld [vmem:[#allocation8 + $0x30] sm:$0xf]
    %v873 = vld [vmem:[#allocation8 + $0x34] sm:$0xf]
    %v874 = vld [vmem:[#allocation8 + $0x38] sm:$0xf]
    %v875 = vld [vmem:[#allocation8 + $0x3c] sm:$0xf]
    %v892 = vunpack.c.l.b16 %v860
    %v893 = vunpack.c.l.b16 %v861
    %v894 = vunpack.c.l.b16 %v862
    %v895 = vunpack.c.l.b16 %v863
    %v896 = vunpack.c.l.b16 %v864
    %v897 = vunpack.c.l.b16 %v865
    %v898 = vunpack.c.l.b16 %v866
    %v899 = vunpack.c.l.b16 %v867
    %v900 = vunpack.c.l.b16 %v868
    %v901 = vunpack.c.l.b16 %v869
    %v902 = vunpack.c.l.b16 %v870
    %v903 = vunpack.c.l.b16 %v871
    %v904 = vunpack.c.l.b16 %v872
    %v905 = vunpack.c.l.b16 %v873
    %v906 = vunpack.c.l.b16 %v874
    %v907 = vunpack.c.l.b16 %v875
    %v908 = vpack.c.b16 %v893, %v892
    %v909 = vpack.c.b16 %v895, %v894
    %v910 = vpack.c.b16 %v897, %v896
    %v911 = vpack.c.b16 %v899, %v898
    %v912 = vpack.c.b16 %v901, %v900
    %v913 = vpack.c.b16 %v903, %v902
    %v914 = vpack.c.b16 %v905, %v904
    %v915 = vpack.c.b16 %v907, %v906
    %924 = vmatprep.subr.bf16.mxu0 0
    %925 = vmatpush1.bf16.msra.mxu0 %v915
    %926 = vmatprep.subr.bf16.mxu0 0
    %927 = vmatpush1.bf16.msra.mxu0 %v914
    %928 = vmatprep.subr.bf16.mxu0 0
    %929 = vmatpush1.bf16.msra.mxu0 %v913
    %930 = vmatprep.subr.bf16.mxu0 0
    %931 = vmatpush1.bf16.msra.mxu0 %v912
    %932 = vmatprep.subr.bf16.mxu0 0
    %933 = vmatpush1.bf16.msra.mxu0 %v911
    %934 = vmatprep.subr.bf16.mxu0 0
    %935 = vmatpush1.bf16.msra.mxu0 %v910
    %936 = vmatprep.subr.bf16.mxu0 0
    %937 = vmatpush1.bf16.msra.mxu0 %v909
    %938 = vmatprep.subr.bf16.mxu0 0
    %939 = vmatpush1.bf16.msra.mxu0 %v908
    %940 = vmatprep.subr.bf16.mxu0 0
    %941 = vmatpush2.bf16.msra.mxu0 0
    %942 = vmatprep.subr.bf16.mxu0 0
    %943 = vmatpush2.bf16.msra.mxu0 0
    %944 = vmatprep.subr.bf16.mxu0 0
    %945 = vmatpush2.bf16.msra.mxu0 0
    %946 = vmatprep.subr.bf16.mxu0 0
    %947 = vmatpush2.bf16.msra.mxu0 0
    %948 = vmatprep.subr.bf16.mxu0 0
    %949 = vmatpush2.bf16.msra.mxu0 0
    %950 = vmatprep.subr.bf16.mxu0 0
    %951 = vmatpush2.bf16.msra.mxu0 0
    %952 = vmatprep.subr.bf16.mxu0 0
    %953 = vmatpush2.bf16.msra.mxu0 0
    %954 = vmatprep.subr.bf16.mxu0 0
    %955 = vmatpush2.bf16.msra.mxu0 0
    %956 = vmatprep.mubr.bf16.mxu0 0
    %957 = vmatmul.mubr.bf16.gmra.mxu0 %v859
    %v958 = vpop.f32.mrf.mxu0
    %v959 = vadd.f32 0.0, %v958
    %v960 = vpop.f32.mrf.mxu0
    %v961 = vpop.f32.mrf.mxu0
    %v962 = vpop.f32.mrf.mxu0
    %963 = vdwg.mxu0
    %v964 = vadd.f32 %v210, %v959
    %965 = vst [vmem:[#allocation11 + $0x30] sm:$0xff] %v964
    %v966 = vpack.c.bf16 %v964, %v964
    %v967 = vld [vmem:[#allocation8] sm:$0xf]
    %v968 = vld [vmem:[#allocation8 + $0x4] sm:$0xf]
    %v969 = vld [vmem:[#allocation8 + $0x8] sm:$0xf]
    %v970 = vld [vmem:[#allocation8 + $0xc] sm:$0xf]
    %v971 = vld [vmem:[#allocation8 + $0x10] sm:$0xf]
    %v972 = vld [vmem:[#allocation8 + $0x14] sm:$0xf]
    %v973 = vld [vmem:[#allocation8 + $0x18] sm:$0xf]
    %v974 = vld [vmem:[#allocation8 + $0x1c] sm:$0xf]
    %v975 = vld [vmem:[#allocation8 + $0x20] sm:$0xf]
    %v976 = vld [vmem:[#allocation8 + $0x24] sm:$0xf]
    %v977 = vld [vmem:[#allocation8 + $0x28] sm:$0xf]
    %v978 = vld [vmem:[#allocation8 + $0x2c] sm:$0xf]
    %v979 = vld [vmem:[#allocation8 + $0x30] sm:$0xf]
    %v980 = vld [vmem:[#allocation8 + $0x34] sm:$0xf]
    %v981 = vld [vmem:[#allocation8 + $0x38] sm:$0xf]
    %v982 = vld [vmem:[#allocation8 + $0x3c] sm:$0xf]
    %v999 = vunpack.c.l.b16 %v967
    %v1000 = vunpack.c.l.b16 %v968
    %v1001 = vunpack.c.l.b16 %v969
    %v1002 = vunpack.c.l.b16 %v970
    %v1003 = vunpack.c.l.b16 %v971
    %v1004 = vunpack.c.l.b16 %v972
    %v1005 = vunpack.c.l.b16 %v973
    %v1006 = vunpack.c.l.b16 %v974
    %v1007 = vunpack.c.l.b16 %v975
    %v1008 = vunpack.c.l.b16 %v976
    %v1009 = vunpack.c.l.b16 %v977
    %v1010 = vunpack.c.l.b16 %v978
    %v1011 = vunpack.c.l.b16 %v979
    %v1012 = vunpack.c.l.b16 %v980
    %v1013 = vunpack.c.l.b16 %v981
    %v1014 = vunpack.c.l.b16 %v982
    %v1015 = vpack.c.b16 %v1000, %v999
    %v1016 = vpack.c.b16 %v1002, %v1001
    %v1017 = vpack.c.b16 %v1004, %v1003
    %v1018 = vpack.c.b16 %v1006, %v1005
    %v1019 = vpack.c.b16 %v1008, %v1007
    %v1020 = vpack.c.b16 %v1010, %v1009
    %v1021 = vpack.c.b16 %v1012, %v1011
    %v1022 = vpack.c.b16 %v1014, %v1013
    %1031 = vmatprep.subr.bf16.mxu0 0
    %1032 = vmatpush1.bf16.msra.mxu0 %v1022
    %1033 = vmatprep.subr.bf16.mxu0 0
    %1034 = vmatpush1.bf16.msra.mxu0 %v1021
    %1035 = vmatprep.subr.bf16.mxu0 0
    %1036 = vmatpush1.bf16.msra.mxu0 %v1020
    %1037 = vmatprep.subr.bf16.mxu0 0
    %1038 = vmatpush1.bf16.msra.mxu0 %v1019
    %1039 = vmatprep.subr.bf16.mxu0 0
    %1040 = vmatpush1.bf16.msra.mxu0 %v1018
    %1041 = vmatprep.subr.bf16.mxu0 0
    %1042 = vmatpush1.bf16.msra.mxu0 %v1017
    %1043 = vmatprep.subr.bf16.mxu0 0
    %1044 = vmatpush1.bf16.msra.mxu0 %v1016
    %1045 = vmatprep.subr.bf16.mxu0 0
    %1046 = vmatpush1.bf16.msra.mxu0 %v1015
    %1047 = vmatprep.subr.bf16.mxu0 0
    %1048 = vmatpush2.bf16.msra.mxu0 0
    %1049 = vmatprep.subr.bf16.mxu0 0
    %1050 = vmatpush2.bf16.msra.mxu0 0
    %1051 = vmatprep.subr.bf16.mxu0 0
    %1052 = vmatpush2.bf16.msra.mxu0 0
    %1053 = vmatprep.subr.bf16.mxu0 0
    %1054 = vmatpush2.bf16.msra.mxu0 0
    %1055 = vmatprep.subr.bf16.mxu0 0
    %1056 = vmatpush2.bf16.msra.mxu0 0
    %1057 = vmatprep.subr.bf16.mxu0 0
    %1058 = vmatpush2.bf16.msra.mxu0 0
    %1059 = vmatprep.subr.bf16.mxu0 0
    %1060 = vmatpush2.bf16.msra.mxu0 0
    %1061 = vmatprep.subr.bf16.mxu0 0
    %1062 = vmatpush2.bf16.msra.mxu0 0
    %1063 = vmatprep.mubr.bf16.mxu0 0
    %1064 = vmatmul.mubr.bf16.gmra.mxu0 %v966
    %v1065 = vpop.f32.mrf.mxu0
    %v1066 = vadd.f32 0.0, %v1065
    %v1067 = vpop.f32.mrf.mxu0
    %v1068 = vpop.f32.mrf.mxu0
    %v1069 = vpop.f32.mrf.mxu0
    %1070 = vdwg.mxu0
    %v1071 = vadd.f32 %v213, %v1066
    %1072 = vst [vmem:[#allocation11 + $0x38] sm:$0xff] %v1071
    %1073 = vst [vmem:[#allocation2] sm:$0xff] %v1071
    // Predicated region
    $region38: #{tpu_custom_call.1} parent=1 // pred_check
      _
    $region39: #{tpu_custom_call.1} parent=1 // pred_check_branch
      %1075 = sbr.rel (0) target = $region41
    $region40: #{tpu_custom_call.1} parent=1 // pred_region
      %s1077 = ssub.s32 1024, 1024
      %1078 = vsyncadd [#allocation5], %s1077
      %s1079 = sshll.u32 [#allocation11], 4
      %s1080 = int_to_ptr.vmem [resolvable:$true] %s1079
      %1085 = dma.vmem_to_hbm [thread:$0]  %s1080, 1024, %s4, [#allocation5], 128, 128, 8
    $region41: #{tpu_custom_call.1} parent=1 // pred_fallthru
      _
    // Predicated region
    $region42: #{tpu_custom_call.1} parent=1 // pred_check
      _
    $region43: #{tpu_custom_call.1} parent=1 // pred_check_branch
      %1087 = sbr.rel (0) target = $region45
    $region44: #{tpu_custom_call.1} parent=1 // pred_region
      %1088 = dma.done [#allocation5], 1024
    $region45: #{tpu_custom_call.1} parent=1 // pred_fallthru
      _
    %1089 = vsyncpa [#allocation4], 1
    %1090 = vsyncpa [#allocation7], 1
    %1091 = vsyncpa [#allocation10], 1
    %1092 = vsyncpa [#allocation5], 1

</llo_original>
